<compile_context>
chip_gen: v5e
topology: v5e:2x2
jax: 0.10.0
libtpu: 0.0.40
codegen_flags: <defaults>
</compile_context>

<pallas_src>
import jax
import jax.numpy as jnp
from jax import lax
from jax.experimental import pallas as pl
from jax.experimental.pallas import tpu as pltpu


def make_mha_kernel(num_heads: int, head_dim: int, embed_dim: int):
    C = embed_dim
    D = head_dim

    def kernel(x_ref, wqkv_ref, bqkv_ref, wp_ref, bp_ref, o_ref):
        x = x_ref[0]                                            # (N, C) bf16

        # --- fused Q/K/V projection: one full-width MXU matmul ------------
        # (scale is pre-folded into the Q columns of Wqkv / bqkv)
        qkv = jnp.dot(x, wqkv_ref[...],
                      preferred_element_type=jnp.float32) + bqkv_ref[...]
        # qkv: (N, 3C) f32, column layout [Q(H*D) | K(H*D) | V(H*D)]

        head_outs = []
        for h in range(num_heads):                              # static unroll
            q = qkv[:, h * D:(h + 1) * D]                       # (N, D) f32
            k = qkv[:, C + h * D: C + (h + 1) * D]              # (N, D) f32
            v = qkv[:, 2 * C + h * D: 2 * C + (h + 1) * D]      # (N, D) f32

            # scores: contract last dims (no explicit K transpose)
            s = lax.dot_general(q.astype(jnp.bfloat16),
                                k.astype(jnp.bfloat16),
                                (((1,), (1,)), ((), ())),
                                preferred_element_type=jnp.float32)  # (N, N)

            # stable softmax in f32; reciprocal on the EUP
            s = s - jnp.max(s, axis=-1, keepdims=True)
            p = jnp.exp(s)
            p = p * pl.reciprocal(jnp.sum(p, axis=-1, keepdims=True),
                                  approx=True)
            # (attn_drop with rate 0.0 is the identity)

            o_h = jnp.dot(p.astype(jnp.bfloat16), v.astype(jnp.bfloat16),
                          preferred_element_type=jnp.float32)   # (N, D)
            head_outs.append(o_h.astype(jnp.bfloat16))

        heads = jnp.concatenate(head_outs, axis=-1)             # (N, C) bf16

        # --- output projection: one full-K matmul -------------------------
        out = jnp.dot(heads, wp_ref[...],
                      preferred_element_type=jnp.float32) + bp_ref[...]
        o_ref[0] = out.astype(o_ref.dtype)

    return kernel


def multi_head_attention(x, wqkv, bqkv, wproj, bproj, num_heads):
    """x: (B, N, C); wqkv: (C, 3C); bqkv: (3C,); wproj: (C, C); bproj: (C,)."""
    B, N, C = x.shape
    D = C // num_heads
    scale = D ** (-0.5)
    out_dtype = x.dtype

    # Fold the attention scale into the Q columns (f32, before bf16 cast).
    col_scale = jnp.concatenate(
        [jnp.full((C,), scale, dtype=jnp.float32),
         jnp.ones((2 * C,), dtype=jnp.float32)])
    wqkv_s = (wqkv.astype(jnp.float32) * col_scale).astype(jnp.bfloat16)   # (C, 3C)
    bqkv_s = (bqkv.astype(jnp.float32) * col_scale).reshape(1, 3 * C)      # (1, 3C) f32

    wp = wproj.astype(jnp.bfloat16)                                        # (C, C)
    bp = bproj.astype(jnp.float32).reshape(1, C)                           # (1, C)

    x_bf = x.astype(jnp.bfloat16)

    kernel = make_mha_kernel(num_heads, D, C)

    return pl.pallas_call(
        kernel,
        out_shape=jax.ShapeDtypeStruct((B, N, C), out_dtype),
        grid_spec=pltpu.PrefetchScalarGridSpec(
            num_scalar_prefetch=0,
            grid=(B,),
            in_specs=[
                pl.BlockSpec((1, N, C), lambda b: (b, 0, 0)),   # x
                pl.BlockSpec((C, 3 * C), lambda b: (0, 0)),     # Wqkv (scaled)
                pl.BlockSpec((1, 3 * C), lambda b: (0, 0)),     # bqkv (scaled)
                pl.BlockSpec((C, C), lambda b: (0, 0)),         # Wproj
                pl.BlockSpec((1, C), lambda b: (0, 0)),         # bproj
            ],
            out_specs=pl.BlockSpec((1, N, C), lambda b: (b, 0, 0)),
        ),
        compiler_params=pltpu.CompilerParams(
            dimension_semantics=("parallel",)),
    )(x_bf, wqkv_s, bqkv_s, wp, bp)


def reference(x, wqkv, bqkv, wproj, bproj, num_heads):
    # Pure-JAX f32 reference mirroring the PyTorch forward.
    B, N, C = x.shape
    D = C // num_heads
    qkv = x @ wqkv + bqkv                                  # (B, N, 3C)
    qkv = qkv.reshape(B, N, 3, num_heads, D).transpose(2, 0, 3, 1, 4)
    q, k, v = qkv[0], qkv[1], qkv[2]                       # (B, H, N, D)
    attn = (q @ jnp.swapaxes(k, -2, -1)) * (D ** -0.5)
    attn = jax.nn.softmax(attn, axis=-1)
    out = (attn @ v).transpose(0, 2, 1, 3).reshape(B, N, C)
    return out @ wproj + bproj


if __name__ == "__main__":
    # Small shapes consistent with the module: B=2, N=8 tokens, C=32 embed,
    # 4 heads (head_dim=8).
    B, N, C, H = 2, 8, 32, 4

    key = jax.random.PRNGKey(0)
    kx, k1, k2, k3, k4 = jax.random.split(key, 5)

    x = jax.random.normal(kx, (B, N, C), dtype=jnp.float32)

    # Deterministic parameter init (Linear weights stored as (in, out);
    # column order of the 3C outputs matches PyTorch's (3, H, D) reshape).
    wqkv = jax.random.normal(k1, (C, 3 * C), dtype=jnp.float32) * 0.1
    bqkv = jax.random.normal(k2, (3 * C,), dtype=jnp.float32) * 0.1
    wproj = jax.random.normal(k3, (C, C), dtype=jnp.float32) * 0.1
    bproj = jax.random.normal(k4, (C,), dtype=jnp.float32) * 0.1

    out = multi_head_attention(x, wqkv, bqkv, wproj, bproj, H)
    out = jax.block_until_ready(out)

    ref = reference(x, wqkv, bqkv, wproj, bproj, H)
    assert out.shape == (B, N, C)
    # bf16 matmul inputs + approx reciprocal -> loosened tolerance vs f32 ref.
    assert jnp.allclose(out, ref, atol=1e-2, rtol=5e-2), "mismatch vs reference"

    print("KERNEL_OK")
</pallas_src>

<mosaic_0001>
module attributes {stable_mosaic.version = 11 : i64} {
  func.func @kernel(%arg0: i32, %arg1: memref<1x8x32xbf16, #tpu.memory_space<vmem>>, %arg2: memref<32x96xbf16, #tpu.memory_space<vmem>>, %arg3: memref<1x96xf32, #tpu.memory_space<vmem>>, %arg4: memref<32x32xbf16, #tpu.memory_space<vmem>>, %arg5: memref<1x32xf32, #tpu.memory_space<vmem>>, %arg6: memref<1x8x32xf32, #tpu.memory_space<vmem>>) attributes {dimension_semantics = [#tpu.dimension_semantics<parallel>], iteration_bounds = array<i64: 2>, scalar_prefetch = 0 : i64, scratch_operands = 0 : i64, tpu.core_type = #tpu.core_type<tc>, window_params = [{transform_indices = @transform_0, window_bounds = array<i64: 1, 8, 32>}, {pipeline_mode = #tpu.pipeline_mode<synchronous>, transform_indices = @transform_1, window_bounds = array<i64: 32, 96>}, {pipeline_mode = #tpu.pipeline_mode<synchronous>, transform_indices = @transform_2, window_bounds = array<i64: 1, 96>}, {pipeline_mode = #tpu.pipeline_mode<synchronous>, transform_indices = @transform_3, window_bounds = array<i64: 32, 32>}, {pipeline_mode = #tpu.pipeline_mode<synchronous>, transform_indices = @transform_4, window_bounds = array<i64: 1, 32>}, {transform_indices = @transform_5, window_bounds = array<i64: 1, 8, 32>}]} {
    %c0 = arith.constant 0 : index
    %c0_0 = arith.constant 0 : index
    %c0_1 = arith.constant 0 : index
    %0 = vector.load %arg1[%c0, %c0_0, %c0_1] : memref<1x8x32xbf16, #tpu.memory_space<vmem>>, vector<1x8x32xbf16>
    %1 = vector.shape_cast %0 : vector<1x8x32xbf16> to vector<8x32xbf16>
    %c0_2 = arith.constant 0 : index
    %c0_3 = arith.constant 0 : index
    %2 = vector.load %arg2[%c0_2, %c0_3] : memref<32x96xbf16, #tpu.memory_space<vmem>>, vector<32x96xbf16>
    %cst = arith.constant dense<0.000000e+00> : vector<8x96xf32>
    %3 = tpu.matmul %1, %2, %cst {dimension_numbers = #tpu.dot_dimension_numbers<[1], [0], [0], [1], [0, 0, 1, 1], [], []>} : vector<8x32xbf16>, vector<32x96xbf16>, vector<8x96xf32> -> vector<8x96xf32>
    %c0_4 = arith.constant 0 : index
    %c0_5 = arith.constant 0 : index
    %4 = vector.load %arg3[%c0_4, %c0_5] : memref<1x96xf32, #tpu.memory_space<vmem>>, vector<1x96xf32>
    %5 = vector.broadcast %4 : vector<1x96xf32> to vector<8x96xf32>
    %6 = arith.addf %3, %5 : vector<8x96xf32>
    %7 = vector.extract_strided_slice %6 {offsets = [0, 0], sizes = [8, 8], strides = [1, 1]} : vector<8x96xf32> to vector<8x8xf32>
    %8 = vector.extract_strided_slice %6 {offsets = [0, 32], sizes = [8, 8], strides = [1, 1]} : vector<8x96xf32> to vector<8x8xf32>
    %9 = vector.extract_strided_slice %6 {offsets = [0, 64], sizes = [8, 8], strides = [1, 1]} : vector<8x96xf32> to vector<8x8xf32>
    %10 = arith.truncf %7 : vector<8x8xf32> to vector<8x8xbf16>
    %11 = arith.truncf %8 : vector<8x8xf32> to vector<8x8xbf16>
    %cst_6 = arith.constant dense<0.000000e+00> : vector<8x8xf32>
    %12 = tpu.matmul %10, %11, %cst_6 {dimension_numbers = #tpu.dot_dimension_numbers<[1], [1], [0], [0], [0, 0, 1, 0], [], []>} : vector<8x8xbf16>, vector<8x8xbf16>, vector<8x8xf32> -> vector<8x8xf32>
    %cst_7 = arith.constant dense<0xFF800000> : vector<8xf32>
    %13 = vector.multi_reduction <maximumf>, %12, %cst_7 [1] : vector<8x8xf32> to vector<8xf32>
    %14 = vector.shape_cast %13 : vector<8xf32> to vector<8x1xf32>
    %15 = vector.broadcast %14 : vector<8x1xf32> to vector<8x8xf32>
    %16 = arith.subf %12, %15 : vector<8x8xf32>
    %17 = math.exp %16 : vector<8x8xf32>
    %cst_8 = arith.constant dense<0.000000e+00> : vector<8xf32>
    %18 = vector.multi_reduction <add>, %17, %cst_8 [1] : vector<8x8xf32> to vector<8xf32>
    %19 = vector.shape_cast %18 : vector<8xf32> to vector<8x1xf32>
    %20 = tpu.reciprocal %19 {approx = true} : vector<8x1xf32> -> vector<8x1xf32>
    %21 = vector.broadcast %20 : vector<8x1xf32> to vector<8x8xf32>
    %22 = arith.mulf %17, %21 : vector<8x8xf32>
    %23 = arith.truncf %22 : vector<8x8xf32> to vector<8x8xbf16>
    %24 = arith.truncf %9 : vector<8x8xf32> to vector<8x8xbf16>
    %cst_9 = arith.constant dense<0.000000e+00> : vector<8x8xf32>
    %25 = tpu.matmul %23, %24, %cst_9 {dimension_numbers = #tpu.dot_dimension_numbers<[1], [0], [0], [1], [0, 0, 1, 1], [], []>} : vector<8x8xbf16>, vector<8x8xbf16>, vector<8x8xf32> -> vector<8x8xf32>
    %26 = arith.truncf %25 : vector<8x8xf32> to vector<8x8xbf16>
    %27 = vector.extract_strided_slice %6 {offsets = [0, 8], sizes = [8, 8], strides = [1, 1]} : vector<8x96xf32> to vector<8x8xf32>
    %28 = vector.extract_strided_slice %6 {offsets = [0, 40], sizes = [8, 8], strides = [1, 1]} : vector<8x96xf32> to vector<8x8xf32>
    %29 = vector.extract_strided_slice %6 {offsets = [0, 72], sizes = [8, 8], strides = [1, 1]} : vector<8x96xf32> to vector<8x8xf32>
    %30 = arith.truncf %27 : vector<8x8xf32> to vector<8x8xbf16>
    %31 = arith.truncf %28 : vector<8x8xf32> to vector<8x8xbf16>
    %cst_10 = arith.constant dense<0.000000e+00> : vector<8x8xf32>
    %32 = tpu.matmul %30, %31, %cst_10 {dimension_numbers = #tpu.dot_dimension_numbers<[1], [1], [0], [0], [0, 0, 1, 0], [], []>} : vector<8x8xbf16>, vector<8x8xbf16>, vector<8x8xf32> -> vector<8x8xf32>
    %cst_11 = arith.constant dense<0xFF800000> : vector<8xf32>
    %33 = vector.multi_reduction <maximumf>, %32, %cst_11 [1] : vector<8x8xf32> to vector<8xf32>
    %34 = vector.shape_cast %33 : vector<8xf32> to vector<8x1xf32>
    %35 = vector.broadcast %34 : vector<8x1xf32> to vector<8x8xf32>
    %36 = arith.subf %32, %35 : vector<8x8xf32>
    %37 = math.exp %36 : vector<8x8xf32>
    %cst_12 = arith.constant dense<0.000000e+00> : vector<8xf32>
    %38 = vector.multi_reduction <add>, %37, %cst_12 [1] : vector<8x8xf32> to vector<8xf32>
    %39 = vector.shape_cast %38 : vector<8xf32> to vector<8x1xf32>
    %40 = tpu.reciprocal %39 {approx = true} : vector<8x1xf32> -> vector<8x1xf32>
    %41 = vector.broadcast %40 : vector<8x1xf32> to vector<8x8xf32>
    %42 = arith.mulf %37, %41 : vector<8x8xf32>
    %43 = arith.truncf %42 : vector<8x8xf32> to vector<8x8xbf16>
    %44 = arith.truncf %29 : vector<8x8xf32> to vector<8x8xbf16>
    %cst_13 = arith.constant dense<0.000000e+00> : vector<8x8xf32>
    %45 = tpu.matmul %43, %44, %cst_13 {dimension_numbers = #tpu.dot_dimension_numbers<[1], [0], [0], [1], [0, 0, 1, 1], [], []>} : vector<8x8xbf16>, vector<8x8xbf16>, vector<8x8xf32> -> vector<8x8xf32>
    %46 = arith.truncf %45 : vector<8x8xf32> to vector<8x8xbf16>
    %47 = vector.extract_strided_slice %6 {offsets = [0, 16], sizes = [8, 8], strides = [1, 1]} : vector<8x96xf32> to vector<8x8xf32>
    %48 = vector.extract_strided_slice %6 {offsets = [0, 48], sizes = [8, 8], strides = [1, 1]} : vector<8x96xf32> to vector<8x8xf32>
    %49 = vector.extract_strided_slice %6 {offsets = [0, 80], sizes = [8, 8], strides = [1, 1]} : vector<8x96xf32> to vector<8x8xf32>
    %50 = arith.truncf %47 : vector<8x8xf32> to vector<8x8xbf16>
    %51 = arith.truncf %48 : vector<8x8xf32> to vector<8x8xbf16>
    %cst_14 = arith.constant dense<0.000000e+00> : vector<8x8xf32>
    %52 = tpu.matmul %50, %51, %cst_14 {dimension_numbers = #tpu.dot_dimension_numbers<[1], [1], [0], [0], [0, 0, 1, 0], [], []>} : vector<8x8xbf16>, vector<8x8xbf16>, vector<8x8xf32> -> vector<8x8xf32>
    %cst_15 = arith.constant dense<0xFF800000> : vector<8xf32>
    %53 = vector.multi_reduction <maximumf>, %52, %cst_15 [1] : vector<8x8xf32> to vector<8xf32>
    %54 = vector.shape_cast %53 : vector<8xf32> to vector<8x1xf32>
    %55 = vector.broadcast %54 : vector<8x1xf32> to vector<8x8xf32>
    %56 = arith.subf %52, %55 : vector<8x8xf32>
    %57 = math.exp %56 : vector<8x8xf32>
    %cst_16 = arith.constant dense<0.000000e+00> : vector<8xf32>
    %58 = vector.multi_reduction <add>, %57, %cst_16 [1] : vector<8x8xf32> to vector<8xf32>
    %59 = vector.shape_cast %58 : vector<8xf32> to vector<8x1xf32>
    %60 = tpu.reciprocal %59 {approx = true} : vector<8x1xf32> -> vector<8x1xf32>
    %61 = vector.broadcast %60 : vector<8x1xf32> to vector<8x8xf32>
    %62 = arith.mulf %57, %61 : vector<8x8xf32>
    %63 = arith.truncf %62 : vector<8x8xf32> to vector<8x8xbf16>
    %64 = arith.truncf %49 : vector<8x8xf32> to vector<8x8xbf16>
    %cst_17 = arith.constant dense<0.000000e+00> : vector<8x8xf32>
    %65 = tpu.matmul %63, %64, %cst_17 {dimension_numbers = #tpu.dot_dimension_numbers<[1], [0], [0], [1], [0, 0, 1, 1], [], []>} : vector<8x8xbf16>, vector<8x8xbf16>, vector<8x8xf32> -> vector<8x8xf32>
    %66 = arith.truncf %65 : vector<8x8xf32> to vector<8x8xbf16>
    %67 = vector.extract_strided_slice %6 {offsets = [0, 24], sizes = [8, 8], strides = [1, 1]} : vector<8x96xf32> to vector<8x8xf32>
    %68 = vector.extract_strided_slice %6 {offsets = [0, 56], sizes = [8, 8], strides = [1, 1]} : vector<8x96xf32> to vector<8x8xf32>
    %69 = vector.extract_strided_slice %6 {offsets = [0, 88], sizes = [8, 8], strides = [1, 1]} : vector<8x96xf32> to vector<8x8xf32>
    %70 = arith.truncf %67 : vector<8x8xf32> to vector<8x8xbf16>
    %71 = arith.truncf %68 : vector<8x8xf32> to vector<8x8xbf16>
    %cst_18 = arith.constant dense<0.000000e+00> : vector<8x8xf32>
    %72 = tpu.matmul %70, %71, %cst_18 {dimension_numbers = #tpu.dot_dimension_numbers<[1], [1], [0], [0], [0, 0, 1, 0], [], []>} : vector<8x8xbf16>, vector<8x8xbf16>, vector<8x8xf32> -> vector<8x8xf32>
    %cst_19 = arith.constant dense<0xFF800000> : vector<8xf32>
    %73 = vector.multi_reduction <maximumf>, %72, %cst_19 [1] : vector<8x8xf32> to vector<8xf32>
    %74 = vector.shape_cast %73 : vector<8xf32> to vector<8x1xf32>
    %75 = vector.broadcast %74 : vector<8x1xf32> to vector<8x8xf32>
    %76 = arith.subf %72, %75 : vector<8x8xf32>
    %77 = math.exp %76 : vector<8x8xf32>
    %cst_20 = arith.constant dense<0.000000e+00> : vector<8xf32>
    %78 = vector.multi_reduction <add>, %77, %cst_20 [1] : vector<8x8xf32> to vector<8xf32>
    %79 = vector.shape_cast %78 : vector<8xf32> to vector<8x1xf32>
    %80 = tpu.reciprocal %79 {approx = true} : vector<8x1xf32> -> vector<8x1xf32>
    %81 = vector.broadcast %80 : vector<8x1xf32> to vector<8x8xf32>
    %82 = arith.mulf %77, %81 : vector<8x8xf32>
    %83 = arith.truncf %82 : vector<8x8xf32> to vector<8x8xbf16>
    %84 = arith.truncf %69 : vector<8x8xf32> to vector<8x8xbf16>
    %cst_21 = arith.constant dense<0.000000e+00> : vector<8x8xf32>
    %85 = tpu.matmul %83, %84, %cst_21 {dimension_numbers = #tpu.dot_dimension_numbers<[1], [0], [0], [1], [0, 0, 1, 1], [], []>} : vector<8x8xbf16>, vector<8x8xbf16>, vector<8x8xf32> -> vector<8x8xf32>
    %86 = arith.truncf %85 : vector<8x8xf32> to vector<8x8xbf16>
    %87 = tpu.concatenate %26, %46, %66, %86 in 1 : vector<8x8xbf16>, vector<8x8xbf16>, vector<8x8xbf16>, vector<8x8xbf16> -> vector<8x32xbf16>
    %c0_22 = arith.constant 0 : index
    %c0_23 = arith.constant 0 : index
    %88 = vector.load %arg4[%c0_22, %c0_23] : memref<32x32xbf16, #tpu.memory_space<vmem>>, vector<32x32xbf16>
    %cst_24 = arith.constant dense<0.000000e+00> : vector<8x32xf32>
    %89 = tpu.matmul %87, %88, %cst_24 {dimension_numbers = #tpu.dot_dimension_numbers<[1], [0], [0], [1], [0, 0, 1, 1], [], []>} : vector<8x32xbf16>, vector<32x32xbf16>, vector<8x32xf32> -> vector<8x32xf32>
    %c0_25 = arith.constant 0 : index
    %c0_26 = arith.constant 0 : index
    %90 = vector.load %arg5[%c0_25, %c0_26] : memref<1x32xf32, #tpu.memory_space<vmem>>, vector<1x32xf32>
    %91 = vector.broadcast %90 : vector<1x32xf32> to vector<8x32xf32>
    %92 = arith.addf %89, %91 : vector<8x32xf32>
    %c0_27 = arith.constant 0 : index
    %c0_28 = arith.constant 0 : index
    %c0_29 = arith.constant 0 : index
    %93 = vector.load %arg6[%c0_27, %c0_28, %c0_29] : memref<1x8x32xf32, #tpu.memory_space<vmem>>, vector<1x8x32xf32>
    %94 = vector.shape_cast %93 : vector<1x8x32xf32> to vector<8x32xf32>
    %95 = vector.shape_cast %92 : vector<8x32xf32> to vector<1x8x32xf32>
    tpu.vector_store %arg6[%c0_27, %c0_28, %c0_29], %95 {strides = array<i32>} : memref<1x8x32xf32, #tpu.memory_space<vmem>>, vector<1x8x32xf32>,
    return
  }
  func.func @transform_0(%arg0: i32) -> (i32, i32, i32) {
    %c0_i32 = arith.constant 0 : i32
    %c0_i32_0 = arith.constant 0 : i32
    %c0_i32_1 = arith.constant 0 : i32
    return %arg0, %c0_i32, %c0_i32_0 : i32, i32, i32
  }
  func.func @transform_1(%arg0: i32) -> (i32, i32) {
    %c0_i32 = arith.constant 0 : i32
    %c0_i32_0 = arith.constant 0 : i32
    %c0_i32_1 = arith.constant 0 : i32
    return %c0_i32, %c0_i32_0 : i32, i32
  }
  func.func @transform_2(%arg0: i32) -> (i32, i32) {
    %c0_i32 = arith.constant 0 : i32
    %c0_i32_0 = arith.constant 0 : i32
    %c0_i32_1 = arith.constant 0 : i32
    return %c0_i32, %c0_i32_0 : i32, i32
  }
  func.func @transform_3(%arg0: i32) -> (i32, i32) {
    %c0_i32 = arith.constant 0 : i32
    %c0_i32_0 = arith.constant 0 : i32
    %c0_i32_1 = arith.constant 0 : i32
    return %c0_i32, %c0_i32_0 : i32, i32
  }
  func.func @transform_4(%arg0: i32) -> (i32, i32) {
    %c0_i32 = arith.constant 0 : i32
    %c0_i32_0 = arith.constant 0 : i32
    %c0_i32_1 = arith.constant 0 : i32
    return %c0_i32, %c0_i32_0 : i32, i32
  }
  func.func @transform_5(%arg0: i32) -> (i32, i32, i32) {
    %c0_i32 = arith.constant 0 : i32
    %c0_i32_0 = arith.constant 0 : i32
    %c0_i32_1 = arith.constant 0 : i32
    return %arg0, %c0_i32, %c0_i32_0 : i32, i32, i32
  }
}

</mosaic_0001>

<llo_original>
// kernel: tpu_custom_call.1
$region0: #{tpu_custom_call.1}
  #allocation0 [shape = 'u32[]', space=smem, size = 0x4, offset = 0x4, fixed_abs, tag = 'smem constant byte address 0x4 - core index']
  #allocation1 [shape = 'u32[72,128]{1,0:T(1,128)}', space=vmem, size = 0x9000, scoped, tag = 'internal scratch']
  %s0 = inlined_call_operand.hbm [shape: bf16[2,8,32], index: 0, kind: input, shape index: {}]
  %s1 = inlined_call_operand.hbm [shape: bf16[32,96], index: 1, kind: input, shape index: {}]
  %s2 = inlined_call_operand.vmem [shape: f32[1,96], index: 2, kind: input, shape index: {}]
  %s3 = inlined_call_operand.hbm [shape: bf16[32,32], index: 3, kind: input, shape index: {}]
  %s4 = inlined_call_operand.vmem [shape: f32[1,32], index: 4, kind: input, shape index: {}]
  %s5 = inlined_call_operand.hbm [shape: f32[2,8,32], index: 5, kind: output, shape index: {}]
  %s6 = sld [smem:[#allocation0]]
  $region65: #{tpu_custom_call.1} parent=0
    _
  %s8 = ssub.s32 1, %s6
  %s9 = scalar_select 0, %s8, %s6
  $region1: #{tpu_custom_call.1} parent=0
    #allocation2 [shape = 'u8[4096]{0}', space=vmem, size = 0x1000, scoped, tag = 'input window, operand 0']
    #allocation3 [shape = 's32[2]{0}', space=sflag, size = 0x8, scoped, tag = 'scoped memory for tpu_custom_call.1']
    #allocation4 [shape = 's32[2]{0}', space=sflag, size = 0x8, scoped, tag = 'scoped memory for tpu_custom_call.1']
    #allocation5 [shape = 'u8[8192]{0}', space=vmem, size = 0x2000, scoped, tag = 'input window, operand 1, single buffered']
    #allocation6 [shape = 's32[1]{0}', space=sflag, size = 0x4, scoped, tag = 'scoped memory for tpu_custom_call.1']
    #allocation7 [shape = 'u8[8192]{0}', space=vmem, size = 0x2000, scoped, tag = 'input window, operand 3, single buffered']
    #allocation8 [shape = 'u8[8192]{0}', space=vmem, size = 0x2000, scoped, tag = 'output window, operand 0']
    %10 = vsyncpa [#allocation3], 0
    %s11 = scalar_lea.sflag [#allocation3], 1
    %12 = vsyncpa %s11, 0
    %13 = vsyncpa [#allocation6], 0
    %14 = vsyncpa [#allocation4], 0
    %s15 = scalar_lea.sflag [#allocation4], 1
    %16 = vsyncpa %s15, 0
    loop: start=0, step=1, limit=4
    $region2: #{tpu_custom_call.1} parent=1 // loop_pre_header
      _
    $region3: #{tpu_custom_call.1} parent=1 // loop_header
      %s18 = sphi 0, %s22
      %p19 = scmp.ge.s32.totalorder %s18, 4
      %s28 = sphi 0, %s30
      %s31 = sphi 0, %s28
      %s32 = sphi 0, %s31
      %s48 = sphi 0, %s32
      %s52 = sphi 0, %s52
      %s54 = sphi 0, %s52
      %s55 = sphi 0, %s54
      %s69 = sphi 0, %s55
      %s73 = sphi 0, %s73
      %s75 = sphi 0, %s73
      %s76 = sphi 0, %s75
      %s90 = sphi 0, %s76
      %s94 = sphi 0, %s94
      %s96 = sphi 0, %s94
      %s97 = sphi 0, %s96
      %s111 = sphi 0, %s97
      %s115 = sphi 0, %s115
      %s117 = sphi 0, %s115
      %s118 = sphi 0, %s117
      %s132 = sphi 0, %s118
      %s138 = sphi 0, %s140
      %s141 = sphi 0, %s138
      %s142 = sphi 0, %s141
      %s158 = sphi 0, %s142
    $region4: #{tpu_custom_call.1} parent=1 // loop_header_branch
      %21 = sbr.rel (%p19) target = $region8
    $region5: #{tpu_custom_call.1} parent=1 // loop_body
      %s23 = ssub.s32 %s18, 1
      %s24 = ssub.s32 %s18, 2
      %s25 = sadd.s32 %s18, 1
      %s26 = ssub.s32 %s18, %s25
      %p27 = scmp.eq.s32.totalorder %s26, 0
      %s29 = sadd.s32 %s28, 1
      %s30 = scalar_select %p27, %s28, %s29
      %p33 = pneg %p27
      %p34 = scmp.eq.s32.totalorder %s18, 1
      %p35 = por %p33, %p34
      %p36 = scmp.ne.s32.totalorder %s28, %s31
      %p37 = scmp.eq.s32.totalorder %s18, 0
      %p38 = por %p36, %p37
      %p39 = scmp.ne.s32.totalorder %s28, %s31
      %p40 = scmp.eq.s32.totalorder %s23, 1
      %p41 = por %p39, %p40
      %p42 = scmp.ne.s32.totalorder %s31, %s32
      %p43 = scmp.eq.s32.totalorder %s23, 0
      %p44 = por %p42, %p43
      %p45 = scmp.ne.s32.totalorder %s31, %s32
      %p46 = scmp.eq.s32.totalorder %s24, 1
      %p47 = por %p45, %p46
      %p49 = scmp.ne.s32.totalorder %s32, %s48
      %p50 = scmp.eq.s32.totalorder %s24, 0
      %p51 = por %p49, %p50
      %s53 = sadd.s32 %s52, 1
      %p56 = scmp.eq.s32.totalorder %s18, 1
      %p57 = scmp.ne.s32.totalorder %s52, %s54
      %p58 = scmp.eq.s32.totalorder %s18, 0
      %p59 = por %p57, %p58
      %p60 = scmp.ne.s32.totalorder %s52, %s54
      %p61 = scmp.eq.s32.totalorder %s23, 1
      %p62 = por %p60, %p61
      %p63 = scmp.ne.s32.totalorder %s54, %s55
      %p64 = scmp.eq.s32.totalorder %s23, 0
      %p65 = por %p63, %p64
      %p66 = scmp.ne.s32.totalorder %s54, %s55
      %p67 = scmp.eq.s32.totalorder %s24, 1
      %p68 = por %p66, %p67
      %p70 = scmp.ne.s32.totalorder %s55, %s69
      %p71 = scmp.eq.s32.totalorder %s24, 0
      %p72 = por %p70, %p71
      %s74 = sadd.s32 %s73, 1
      %p77 = scmp.eq.s32.totalorder %s18, 1
      %p78 = scmp.ne.s32.totalorder %s73, %s75
      %p79 = scmp.eq.s32.totalorder %s18, 0
      %p80 = por %p78, %p79
      %p81 = scmp.ne.s32.totalorder %s73, %s75
      %p82 = scmp.eq.s32.totalorder %s23, 1
      %p83 = por %p81, %p82
      %p84 = scmp.ne.s32.totalorder %s75, %s76
      %p85 = scmp.eq.s32.totalorder %s23, 0
      %p86 = por %p84, %p85
      %p87 = scmp.ne.s32.totalorder %s75, %s76
      %p88 = scmp.eq.s32.totalorder %s24, 1
      %p89 = por %p87, %p88
      %p91 = scmp.ne.s32.totalorder %s76, %s90
      %p92 = scmp.eq.s32.totalorder %s24, 0
      %p93 = por %p91, %p92
      %s95 = sadd.s32 %s94, 1
      %p98 = scmp.eq.s32.totalorder %s18, 1
      %p99 = scmp.ne.s32.totalorder %s94, %s96
      %p100 = scmp.eq.s32.totalorder %s18, 0
      %p101 = por %p99, %p100
      %p102 = scmp.ne.s32.totalorder %s94, %s96
      %p103 = scmp.eq.s32.totalorder %s23, 1
      %p104 = por %p102, %p103
      %p105 = scmp.ne.s32.totalorder %s96, %s97
      %p106 = scmp.eq.s32.totalorder %s23, 0
      %p107 = por %p105, %p106
      %p108 = scmp.ne.s32.totalorder %s96, %s97
      %p109 = scmp.eq.s32.totalorder %s24, 1
      %p110 = por %p108, %p109
      %p112 = scmp.ne.s32.totalorder %s97, %s111
      %p113 = scmp.eq.s32.totalorder %s24, 0
      %p114 = por %p112, %p113
      %s116 = sadd.s32 %s115, 1
      %p119 = scmp.eq.s32.totalorder %s18, 1
      %p120 = scmp.ne.s32.totalorder %s115, %s117
      %p121 = scmp.eq.s32.totalorder %s18, 0
      %p122 = por %p120, %p121
      %p123 = scmp.ne.s32.totalorder %s115, %s117
      %p124 = scmp.eq.s32.totalorder %s23, 1
      %p125 = por %p123, %p124
      %p126 = scmp.ne.s32.totalorder %s117, %s118
      %p127 = scmp.eq.s32.totalorder %s23, 0
      %p128 = por %p126, %p127
      %p129 = scmp.ne.s32.totalorder %s117, %s118
      %p130 = scmp.eq.s32.totalorder %s24, 1
      %p131 = por %p129, %p130
      %p133 = scmp.ne.s32.totalorder %s118, %s132
      %p134 = scmp.eq.s32.totalorder %s24, 0
      %p135 = por %p133, %p134
      %s136 = ssub.s32 %s18, %s25
      %p137 = scmp.eq.s32.totalorder %s136, 0
      %s139 = sadd.s32 %s138, 1
      %s140 = scalar_select %p137, %s138, %s139
      %p143 = pneg %p137
      %p144 = scmp.eq.s32.totalorder %s18, 1
      %p145 = por %p143, %p144
      %p146 = scmp.ne.s32.totalorder %s138, %s141
      %p147 = scmp.eq.s32.totalorder %s18, 0
      %p148 = por %p146, %p147
      %p149 = scmp.ne.s32.totalorder %s138, %s141
      %p150 = scmp.eq.s32.totalorder %s23, 1
      %p151 = por %p149, %p150
      %p152 = scmp.ne.s32.totalorder %s141, %s142
      %p153 = scmp.eq.s32.totalorder %s23, 0
      %p154 = por %p152, %p153
      %p155 = scmp.ne.s32.totalorder %s141, %s142
      %p156 = scmp.eq.s32.totalorder %s24, 1
      %p157 = por %p155, %p156
      %p159 = scmp.ne.s32.totalorder %s142, %s158
      %p160 = scmp.eq.s32.totalorder %s24, 0
      %p161 = por %p159, %p160
      %p162 = scmp.le.s32.totalorder 1, %s18
      %p163 = scmp.lt.s32.totalorder %s18, 3
      %p164 = pnand %p162, %p163
      %p165 = pneg %p164
      // Predicated region
      $region9: #{tpu_custom_call.1} parent=5 // pred_check
        _
      $region10: #{tpu_custom_call.1} parent=5 // pred_check_branch
        %167 = sbr.rel (%p164) target = $region12
      $region11: #{tpu_custom_call.1} parent=5 // pred_region
        %s168 = ssub.s32 %s18, 1
        // Predicated region
        $region13: #{tpu_custom_call.1} parent=11 // pred_check
          %p169 = pneg %p65
        $region14: #{tpu_custom_call.1} parent=11 // pred_check_branch
          %171 = sbr.rel (%p169) target = $region16
        $region15: #{tpu_custom_call.1} parent=11 // pred_region
          %173 = vsyncadd [#allocation6], 0
          %s174 = sshll.u32 %s1, 4
          %s175 = int_to_ptr.hbm [resolvable:$true] %s174
          %s176 = sshll.u32 [#allocation5], 4
          %s177 = int_to_ptr.vmem [resolvable:$true] %s176
          %182 = dma.hbm_to_vmem [thread:$0]  %s175, 256, %s177, [#allocation6], 64, 64, 4
        $region16: #{tpu_custom_call.1} parent=11 // pred_fallthru
          _
        // Predicated region
        $region17: #{tpu_custom_call.1} parent=11 // pred_check
          %p183 = pneg %p86
        $region18: #{tpu_custom_call.1} parent=11 // pred_check_branch
          %185 = sbr.rel (%p183) target = $region20
        $region19: #{tpu_custom_call.1} parent=11 // pred_region
          _
        $region20: #{tpu_custom_call.1} parent=11 // pred_fallthru
          _
        // Predicated region
        $region21: #{tpu_custom_call.1} parent=11 // pred_check
          %p186 = pneg %p107
        $region22: #{tpu_custom_call.1} parent=11 // pred_check_branch
          %188 = sbr.rel (%p186) target = $region24
        $region23: #{tpu_custom_call.1} parent=11 // pred_region
          %190 = vsyncadd [#allocation6], 0
          %s191 = sshll.u32 %s3, 4
          %s192 = int_to_ptr.hbm [resolvable:$true] %s191
          %s193 = sshll.u32 [#allocation7], 4
          %s194 = int_to_ptr.vmem [resolvable:$true] %s193
          %199 = dma.hbm_to_vmem [thread:$0]  %s192, 256, %s194, [#allocation6], 64, 64, 4
        $region24: #{tpu_custom_call.1} parent=11 // pred_fallthru
          _
        // Predicated region
        $region25: #{tpu_custom_call.1} parent=11 // pred_check
          %p200 = pneg %p128
        $region26: #{tpu_custom_call.1} parent=11 // pred_check_branch
          %202 = sbr.rel (%p200) target = $region28
        $region27: #{tpu_custom_call.1} parent=11 // pred_region
          _
        $region28: #{tpu_custom_call.1} parent=11 // pred_fallthru
          _
      $region12: #{tpu_custom_call.1} parent=5 // pred_fallthru
        _
      %p203 = scmp.lt.s32.totalorder %s18, 2
      // Predicated region
      $region29: #{tpu_custom_call.1} parent=5 // pred_check
        %p204 = pneg %p203
      $region30: #{tpu_custom_call.1} parent=5 // pred_check_branch
        %206 = sbr.rel (%p204) target = $region32
      $region31: #{tpu_custom_call.1} parent=5 // pred_region
        // Predicated region
        $region33: #{tpu_custom_call.1} parent=31 // pred_check
          %p207 = pneg %p38
        $region34: #{tpu_custom_call.1} parent=31 // pred_check_branch
          %209 = sbr.rel (%p207) target = $region36
        $region35: #{tpu_custom_call.1} parent=31 // pred_region
          %s210 = sand.u32 %s28, 1
          %s211 = scalar_lea.sflag [#allocation3], %s210
          %s212 = sand.u32 %s28, 1
          %s213 = smul.addr %s212, 4
          %s214 = scalar_lea.vmem [#allocation2], %s213
          %216 = vsyncadd %s211, 0
          %s217 = smul.addr %s18, 4
          %s218 = scalar_lea.hbm %s0, %s217
          %s220 = sshll.u32 %s218, 4
          %s221 = int_to_ptr.hbm [resolvable:$true] %s220
          %s222 = sshll.u32 %s214, 4
          %s223 = int_to_ptr.vmem [resolvable:$true] %s222
          %225 = dma.hbm_to_vmem [thread:$0]  %s221, 64, %s223, %s211
        $region36: #{tpu_custom_call.1} parent=31 // pred_fallthru
          _
      $region32: #{tpu_custom_call.1} parent=5 // pred_fallthru
        _
      %p226 = scmp.le.s32.totalorder 1, %s18
      %p227 = scmp.lt.s32.totalorder %s18, 3
      %p228 = pnand %p226, %p227
      %p229 = pneg %p228
      // Predicated region
      $region37: #{tpu_custom_call.1} parent=5 // pred_check
        _
      $region38: #{tpu_custom_call.1} parent=5 // pred_check_branch
        %231 = sbr.rel (%p228) target = $region40
      $region39: #{tpu_custom_call.1} parent=5 // pred_region
        %s232 = ssub.s32 %s18, 1
        %s233 = sand.u32 %s31, 1
        %s234 = scalar_lea.sflag [#allocation3], %s233
        %s235 = sand.u32 %s31, 1
        %s236 = smul.addr %s235, 4
        %s237 = scalar_lea.vmem [#allocation2], %s236
        // Predicated region
        $region41: #{tpu_custom_call.1} parent=39 // pred_check
          %p238 = pneg %p44
        $region42: #{tpu_custom_call.1} parent=39 // pred_check_branch
          %240 = sbr.rel (%p238) target = $region44
        $region43: #{tpu_custom_call.1} parent=39 // pred_region
          %242 = dma.done %s234, 64
        $region44: #{tpu_custom_call.1} parent=39 // pred_fallthru
          _
        // Predicated region
        $region45: #{tpu_custom_call.1} parent=39 // pred_check
          %p243 = pneg %p65
        $region46: #{tpu_custom_call.1} parent=39 // pred_check_branch
          %245 = sbr.rel (%p243) target = $region48
        $region47: #{tpu_custom_call.1} parent=39 // pred_region
          %247 = dma.done [#allocation6], 256
        $region48: #{tpu_custom_call.1} parent=39 // pred_fallthru
          _
        // Predicated region
        $region49: #{tpu_custom_call.1} parent=39 // pred_check
          %p248 = pneg %p107
        $region50: #{tpu_custom_call.1} parent=39 // pred_check_branch
          %250 = sbr.rel (%p248) target = $region52
        $region51: #{tpu_custom_call.1} parent=39 // pred_region
          %252 = dma.done [#allocation6], 256
        $region52: #{tpu_custom_call.1} parent=39 // pred_fallthru
          _
        %s253 = sand.u32 %s31, 1
        %s254 = scalar_lea.sflag [#allocation3], %s253
        %s255 = sand.u32 %s31, 1
        %s256 = smul.addr %s255, 4
        %s257 = scalar_lea.vmem [#allocation2], %s256
        %p258 = pneg %p44
        %p259 = pneg %p41
        %p260 = pneg %p65
        %p261 = pneg %p62
        %p262 = pneg %p86
        %p263 = pneg %p83
        %p264 = pneg %p107
        %p265 = pneg %p104
        %p266 = pneg %p128
        %p267 = pneg %p125
        %p268 = pneg %p154
        %p269 = pneg %p151
        %s270 = sand.u32 %s141, 1
        %s271 = scalar_lea.sflag [#allocation4], %s270
        %s272 = sand.u32 %s141, 1
        %s273 = smul.addr %s272, 8
        %s274 = scalar_lea.vmem [#allocation8], %s273
        %v276 = vld [vmem:[%s237] sm:$0xf]
        %v277 = vld [vmem:[#allocation5] sm:$0xf]
        %v278 = vld [vmem:[#allocation5 + $0x4] sm:$0xf]
        %v279 = vld [vmem:[#allocation5 + $0x8] sm:$0xf]
        %v280 = vld [vmem:[#allocation5 + $0xc] sm:$0xf]
        %v281 = vld [vmem:[%s2] sm:$0x1]
        %v283 = vperm.slane %v281, 0
        %v289 = vunpack.c.l.b16 %v277
        %v290 = vunpack.c.l.b16 %v278
        %v291 = vunpack.c.l.b16 %v279
        %v292 = vunpack.c.l.b16 %v280
        %v293 = vpack.c.b16 %v290, %v289
        %v294 = vpack.c.b16 %v292, %v291
        %vm297 = vcmask 261120
        %v299 = vsel %vm297, %v276, 0
        %301 = vmatpush.bf16.msra.mxu0 0
        %302 = vmatpush.bf16.msra.mxu0 0
        %303 = vmatpush.bf16.msra.mxu0 0
        %304 = vmatpush.bf16.msra.mxu0 0
        %305 = vmatpush.bf16.msra.mxu0 0
        %306 = vmatpush.bf16.msra.mxu0 0
        %307 = vmatpush.bf16.msra.mxu0 %v294
        %308 = vmatpush.bf16.msra.mxu0 %v293
        %309 = vmatmul.bf16.gmra.mxu0 %v299
        %v310 = vpop.f32.mrf.mxu0
        %v311 = vadd.f32 %v283, %v310
        %v312 = vpop.f32.mrf.mxu0
        %313 = vdwg.mxu0
        %v314 = vpack.c.bf16 %v311, %v311
        %316 = vrot.lane.b32.xlu0 %v314, 96
        %v317 = vpop.permute.xlu0 %316
        %vm318 = vcmask 64512
        %v320 = vsel %vm318, %v314, 0
        %v323 = vsel %vm318, %v317, 0
        %325 = vmatpush.bf16.xpose.msra.mxu0 0
        %326 = vmatpush.bf16.xpose.msra.mxu0 0
        %327 = vmatpush.bf16.xpose.msra.mxu0 0
        %328 = vmatpush.bf16.xpose.msra.mxu0 0
        %329 = vmatpush.bf16.xpose.msra.mxu0 0
        %330 = vmatpush.bf16.xpose.msra.mxu0 0
        %331 = vmatpush.bf16.xpose.msra.mxu0 0
        %332 = vmatpush.bf16.xpose.msra.mxu0 %v323
        %333 = vmatmul.bf16.gmra.mxu0 %v320
        %v334 = vpop.f32.mrf.mxu0
        %v335 = vadd.f32 0.0, %v334
        %v336 = vpop.f32.mrf.mxu0
        %337 = vdwg.mxu0
        %v338 = vsel %vm318, %v335, -inf
        %339 = vmax.xlane.f32.xlu0 %v338
        %v340 = vpop.xlane.xlu0 %339
        %v341 = vsub.f32 %v335, %v340
        %v342 = vmul.f32 %v341, 1.442695
        %v343 = vpow.pop %v342
        %v344 = vsel %vm318, %v343, 0.0
        %345 = vadd.xlane.f32.xlu0 %v344
        %v346 = vpop.xlane.xlu0 %345
        %v347 = vrcp.pop %v346
        %v348 = vmul.f32 %v343, %v347
        %v349 = vpack.c.bf16 %v348, %v348
        %350 = vrot.lane.b32.xlu0 %v314, 64
        %v351 = vpop.permute.xlu0 %350
        %v353 = vsel %vm318, %v349, 0
        %vm355 = vcmask 1043456
        %v357 = vsel %vm355, %v351, 0
        %359 = vmatpush.bf16.msra.mxu0 0
        %360 = vmatpush.bf16.msra.mxu0 0
        %361 = vmatpush.bf16.msra.mxu0 0
        %362 = vmatpush.bf16.msra.mxu0 0
        %363 = vmatpush.bf16.msra.mxu0 0
        %364 = vmatpush.bf16.msra.mxu0 0
        %365 = vmatpush.bf16.msra.mxu0 0
        %366 = vmatpush.bf16.msra.mxu0 %v357
        %367 = vmatmul.bf16.gmra.mxu0 %v353
        %v368 = vpop.f32.mrf.mxu0
        %v369 = vadd.f32 0.0, %v368
        %v370 = vpop.f32.mrf.mxu0
        %371 = vdwg.mxu0
        %v372 = vpack.c.bf16 %v369, %v369
        %373 = vrot.lane.b32.xlu0 %v314, 120
        %v374 = vpop.permute.xlu0 %373
        %375 = vrot.lane.b32.xlu0 %v314, 88
        %v376 = vpop.permute.xlu0 %375
        %v378 = vsel %vm318, %v374, 0
        %v381 = vsel %vm318, %v376, 0
        %383 = vmatpush.bf16.xpose.msra.mxu0 0
        %384 = vmatpush.bf16.xpose.msra.mxu0 0
        %385 = vmatpush.bf16.xpose.msra.mxu0 0
        %386 = vmatpush.bf16.xpose.msra.mxu0 0
        %387 = vmatpush.bf16.xpose.msra.mxu0 0
        %388 = vmatpush.bf16.xpose.msra.mxu0 0
        %389 = vmatpush.bf16.xpose.msra.mxu0 0
        %390 = vmatpush.bf16.xpose.msra.mxu0 %v381
        %391 = vmatmul.bf16.gmra.mxu0 %v378
        %v392 = vpop.f32.mrf.mxu0
        %v393 = vadd.f32 0.0, %v392
        %v394 = vpop.f32.mrf.mxu0
        %395 = vdwg.mxu0
        %v396 = vsel %vm318, %v393, -inf
        %397 = vmax.xlane.f32.xlu0 %v396
        %v398 = vpop.xlane.xlu0 %397
        %v399 = vsub.f32 %v393, %v398
        %v400 = vmul.f32 %v399, 1.442695
        %v401 = vpow.pop %v400
        %v402 = vsel %vm318, %v401, 0.0
        %403 = vadd.xlane.f32.xlu0 %v402
        %v404 = vpop.xlane.xlu0 %403
        %v405 = vrcp.pop %v404
        %v406 = vmul.f32 %v401, %v405
        %v407 = vpack.c.bf16 %v406, %v406
        %408 = vrot.lane.b32.xlu0 %v314, 56
        %v409 = vpop.permute.xlu0 %408
        %v411 = vsel %vm318, %v407, 0
        %v414 = vsel %vm355, %v409, 0
        %416 = vmatpush.bf16.msra.mxu0 0
        %417 = vmatpush.bf16.msra.mxu0 0
        %418 = vmatpush.bf16.msra.mxu0 0
        %419 = vmatpush.bf16.msra.mxu0 0
        %420 = vmatpush.bf16.msra.mxu0 0
        %421 = vmatpush.bf16.msra.mxu0 0
        %422 = vmatpush.bf16.msra.mxu0 0
        %423 = vmatpush.bf16.msra.mxu0 %v414
        %424 = vmatmul.bf16.gmra.mxu0 %v411
        %v425 = vpop.f32.mrf.mxu0
        %v426 = vadd.f32 0.0, %v425
        %v427 = vpop.f32.mrf.mxu0
        %428 = vdwg.mxu0
        %v429 = vpack.c.bf16 %v426, %v426
        %430 = vrot.lane.b32.xlu0 %v314, 112
        %v431 = vpop.permute.xlu0 %430
        %432 = vrot.lane.b32.xlu0 %v314, 80
        %v433 = vpop.permute.xlu0 %432
        %v435 = vsel %vm318, %v431, 0
        %v438 = vsel %vm318, %v433, 0
        %440 = vmatpush.bf16.xpose.msra.mxu0 0
        %441 = vmatpush.bf16.xpose.msra.mxu0 0
        %442 = vmatpush.bf16.xpose.msra.mxu0 0
        %443 = vmatpush.bf16.xpose.msra.mxu0 0
        %444 = vmatpush.bf16.xpose.msra.mxu0 0
        %445 = vmatpush.bf16.xpose.msra.mxu0 0
        %446 = vmatpush.bf16.xpose.msra.mxu0 0
        %447 = vmatpush.bf16.xpose.msra.mxu0 %v438
        %448 = vmatmul.bf16.gmra.mxu0 %v435
        %v449 = vpop.f32.mrf.mxu0
        %v450 = vadd.f32 0.0, %v449
        %v451 = vpop.f32.mrf.mxu0
        %452 = vdwg.mxu0
        %v453 = vsel %vm318, %v450, -inf
        %454 = vmax.xlane.f32.xlu0 %v453
        %v455 = vpop.xlane.xlu0 %454
        %v456 = vsub.f32 %v450, %v455
        %v457 = vmul.f32 %v456, 1.442695
        %v458 = vpow.pop %v457
        %v459 = vsel %vm318, %v458, 0.0
        %460 = vadd.xlane.f32.xlu0 %v459
        %v461 = vpop.xlane.xlu0 %460
        %v462 = vrcp.pop %v461
        %v463 = vmul.f32 %v458, %v462
        %v464 = vpack.c.bf16 %v463, %v463
        %465 = vrot.lane.b32.xlu0 %v314, 48
        %v466 = vpop.permute.xlu0 %465
        %v468 = vsel %vm318, %v464, 0
        %v471 = vsel %vm355, %v466, 0
        %473 = vmatpush.bf16.msra.mxu0 0
        %474 = vmatpush.bf16.msra.mxu0 0
        %475 = vmatpush.bf16.msra.mxu0 0
        %476 = vmatpush.bf16.msra.mxu0 0
        %477 = vmatpush.bf16.msra.mxu0 0
        %478 = vmatpush.bf16.msra.mxu0 0
        %479 = vmatpush.bf16.msra.mxu0 0
        %480 = vmatpush.bf16.msra.mxu0 %v471
        %481 = vmatmul.bf16.gmra.mxu0 %v468
        %v482 = vpop.f32.mrf.mxu0
        %v483 = vadd.f32 0.0, %v482
        %v484 = vpop.f32.mrf.mxu0
        %485 = vdwg.mxu0
        %v486 = vpack.c.bf16 %v483, %v483
        %487 = vrot.lane.b32.xlu0 %v314, 104
        %v488 = vpop.permute.xlu0 %487
        %489 = vrot.lane.b32.xlu0 %v314, 72
        %v490 = vpop.permute.xlu0 %489
        %v492 = vsel %vm318, %v488, 0
        %v495 = vsel %vm318, %v490, 0
        %497 = vmatpush.bf16.xpose.msra.mxu0 0
        %498 = vmatpush.bf16.xpose.msra.mxu0 0
        %499 = vmatpush.bf16.xpose.msra.mxu0 0
        %500 = vmatpush.bf16.xpose.msra.mxu0 0
        %501 = vmatpush.bf16.xpose.msra.mxu0 0
        %502 = vmatpush.bf16.xpose.msra.mxu0 0
        %503 = vmatpush.bf16.xpose.msra.mxu0 0
        %504 = vmatpush.bf16.xpose.msra.mxu0 %v495
        %505 = vmatmul.bf16.gmra.mxu0 %v492
        %v506 = vpop.f32.mrf.mxu0
        %v507 = vadd.f32 0.0, %v506
        %v508 = vpop.f32.mrf.mxu0
        %509 = vdwg.mxu0
        %v510 = vsel %vm318, %v507, -inf
        %511 = vmax.xlane.f32.xlu0 %v510
        %v512 = vpop.xlane.xlu0 %511
        %v513 = vsub.f32 %v507, %v512
        %v514 = vmul.f32 %v513, 1.442695
        %v515 = vpow.pop %v514
        %v516 = vsel %vm318, %v515, 0.0
        %517 = vadd.xlane.f32.xlu0 %v516
        %v518 = vpop.xlane.xlu0 %517
        %v519 = vrcp.pop %v518
        %v520 = vmul.f32 %v515, %v519
        %v521 = vpack.c.bf16 %v520, %v520
        %522 = vrot.lane.b32.xlu0 %v314, 40
        %v523 = vpop.permute.xlu0 %522
        %v525 = vsel %vm318, %v521, 0
        %v528 = vsel %vm355, %v523, 0
        %530 = vmatpush.bf16.msra.mxu0 0
        %531 = vmatpush.bf16.msra.mxu0 0
        %532 = vmatpush.bf16.msra.mxu0 0
        %533 = vmatpush.bf16.msra.mxu0 0
        %534 = vmatpush.bf16.msra.mxu0 0
        %535 = vmatpush.bf16.msra.mxu0 0
        %536 = vmatpush.bf16.msra.mxu0 0
        %537 = vmatpush.bf16.msra.mxu0 %v528
        %538 = vmatmul.bf16.gmra.mxu0 %v525
        %v539 = vpop.f32.mrf.mxu0
        %v540 = vadd.f32 0.0, %v539
        %v541 = vpop.f32.mrf.mxu0
        %542 = vdwg.mxu0
        %v543 = vpack.c.bf16 %v540, %v540
        %v545 = vunpack.c.l.b16 %v429
        %v546 = vpack.c.b16 %v545, %v545
        %547 = vrot.lane.b32.xlu0 %v546, 8
        %v548 = vpop.permute.xlu0 %547
        %v550 = vunpack.c.l.b16 %v486
        %v551 = vpack.c.b16 %v550, %v550
        %552 = vrot.lane.b32.xlu0 %v551, 16
        %v553 = vpop.permute.xlu0 %552
        %v555 = vunpack.c.l.b16 %v543
        %v556 = vpack.c.b16 %v555, %v555
        %557 = vrot.lane.b32.xlu0 %v556, 24
        %v558 = vpop.permute.xlu0 %557
        %v561 = vsel %vm318, %v372, %v548
        %vm562 = vcmask 130048
        %v564 = vsel %vm562, %v561, %v553
        %vm565 = vcmask 195584
        %v567 = vsel %vm565, %v564, %v558
        %v568 = vld [vmem:[#allocation7] sm:$0xf]
        %v569 = vld [vmem:[#allocation7 + $0x4] sm:$0xf]
        %v570 = vld [vmem:[#allocation7 + $0x8] sm:$0xf]
        %v571 = vld [vmem:[#allocation7 + $0xc] sm:$0xf]
        %v572 = vld [vmem:[%s4] sm:$0x1]
        %v574 = vperm.slane %v572, 0
        %v580 = vunpack.c.l.b16 %v568
        %v581 = vunpack.c.l.b16 %v569
        %v582 = vunpack.c.l.b16 %v570
        %v583 = vunpack.c.l.b16 %v571
        %v584 = vpack.c.b16 %v581, %v580
        %v585 = vpack.c.b16 %v583, %v582
        %v588 = vsel %vm297, %v567, 0
        %590 = vmatpush.bf16.msra.mxu0 0
        %591 = vmatpush.bf16.msra.mxu0 0
        %592 = vmatpush.bf16.msra.mxu0 0
        %593 = vmatpush.bf16.msra.mxu0 0
        %594 = vmatpush.bf16.msra.mxu0 0
        %595 = vmatpush.bf16.msra.mxu0 0
        %596 = vmatpush.bf16.msra.mxu0 %v585
        %597 = vmatpush.bf16.msra.mxu0 %v584
        %598 = vmatmul.bf16.gmra.mxu0 %v588
        %v599 = vpop.f32.mrf.mxu0
        %v600 = vadd.f32 %v574, %v599
        %v601 = vpop.f32.mrf.mxu0
        %602 = vdwg.mxu0
        %603 = vst.msk [vmem:[%s274] sm:$0xff] %vm297, %v600
        %s604 = sand.u32 %s141, 1
        %s605 = scalar_lea.sflag [#allocation4], %s604
        %s606 = sand.u32 %s141, 1
        %s607 = smul.addr %s606, 8
        %s608 = scalar_lea.vmem [#allocation8], %s607
        // Predicated region
        $region53: #{tpu_custom_call.1} parent=39 // pred_check
          %p609 = pneg %p151
        $region54: #{tpu_custom_call.1} parent=39 // pred_check_branch
          %611 = sbr.rel (%p609) target = $region56
        $region55: #{tpu_custom_call.1} parent=39 // pred_region
          %613 = vsyncadd %s605, 0
          %s614 = smul.addr %s23, 8
          %s615 = scalar_lea.hbm %s5, %s614
          %s617 = sshll.u32 %s608, 4
          %s618 = int_to_ptr.vmem [resolvable:$true] %s617
          %s619 = sshll.u32 %s615, 4
          %s620 = int_to_ptr.hbm [resolvable:$true] %s619
          %622 = dma.vmem_to_hbm [thread:$0]  %s618, 128, %s620, %s605
        $region56: #{tpu_custom_call.1} parent=39 // pred_fallthru
          _
      $region40: #{tpu_custom_call.1} parent=5 // pred_fallthru
        _
      %p623 = scmp.le.s32.totalorder 2, %s18
      // Predicated region
      $region57: #{tpu_custom_call.1} parent=5 // pred_check
        %p624 = pneg %p623
      $region58: #{tpu_custom_call.1} parent=5 // pred_check_branch
        %626 = sbr.rel (%p624) target = $region60
      $region59: #{tpu_custom_call.1} parent=5 // pred_region
        %s627 = ssub.s32 %s18, 2
        // Predicated region
        $region61: #{tpu_custom_call.1} parent=59 // pred_check
          %p628 = pneg %p157
        $region62: #{tpu_custom_call.1} parent=59 // pred_check_branch
          %630 = sbr.rel (%p628) target = $region64
        $region63: #{tpu_custom_call.1} parent=59 // pred_region
          %s631 = sand.u32 %s142, 1
          %s632 = scalar_lea.sflag [#allocation4], %s631
          %s633 = sand.u32 %s142, 1
          %s634 = smul.addr %s633, 8
          %s635 = scalar_lea.vmem [#allocation8], %s634
          %637 = dma.done %s632, 128
        $region64: #{tpu_custom_call.1} parent=59 // pred_fallthru
          _
      $region60: #{tpu_custom_call.1} parent=5 // pred_fallthru
        _
    $region6: #{tpu_custom_call.1} parent=1 // loop_footer
      %s22 = sadd.s32 1, %s18
    $region7: #{tpu_custom_call.1} parent=1 // loop_footer_branch
      %17 = sbr.rel target = $region3
    $region8: #{tpu_custom_call.1} parent=1 // loop_exit
      _
    %638 = vsyncpa [#allocation3], 1
    %s639 = scalar_lea.sflag [#allocation3], 1
    %640 = vsyncpa %s639, 1
    %641 = vsyncpa [#allocation6], 1
    %642 = vsyncpa [#allocation4], 1
    %s643 = scalar_lea.sflag [#allocation4], 1
    %644 = vsyncpa %s643, 1

</llo_original>
